<compile_context>
chip_gen: v5e
topology: v5e:2x2
jax: 0.10.0
libtpu: 0.0.40
codegen_flags: <defaults>
</compile_context>

<pallas_src>
import jax
import jax.numpy as jnp
from jax.experimental import pallas as pl
from jax.experimental.pallas import tpu as pltpu


def linear_sub_relu_kernel(xT_ref, w_ref, b_ref, oT_ref):
    # xT_ref: (K=3, TM)   -- batch on the 128-lane axis (lane-dense)
    # w_ref : (N=8, K=3)  -- resident across the grid (constant index_map)
    # b_ref : (N=8, 1)    -- bias with -0.5 already folded in
    # oT_ref: (N=8, TM)   -- lane-dense output block (unmasked stores)
    xT = xT_ref[...]
    w = w_ref[...]
    # K=3 contraction as 3 VPU broadcast multiply-adds: (8,1)*(1,TM) -> (8,TM).
    acc = w[:, 0:1] * xT[0:1, :]
    acc = acc + w[:, 1:2] * xT[1:2, :]
    acc = acc + w[:, 2:3] * xT[2:3, :]
    oT_ref[...] = jnp.maximum(acc + b_ref[...], 0.0).astype(oT_ref.dtype)


def _round_up(v, m):
    return ((v + m - 1) // m) * m


def model_forward(x, weight, bias, *, tile_m=65536, min_pallas_m=1024,
                  out_layout="batch_major", force_pallas=False):
    """x: (M, 3) f32; weight: (8, 3) f32 (PyTorch layout); bias: (8,) f32.

    Returns relu(x @ weight.T + bias - 0.5):
      out_layout="batch_major"   -> (M, 8)  (PyTorch-facing, default)
      out_layout="feature_major" -> (8, M)  (kernel-native, skips the final transpose)
    """
    M, K = x.shape
    N = weight.shape[0]
    assert tile_m % 128 == 0, "tile_m must be a multiple of 128 (lane constraint)"

    w = weight.astype(jnp.float32)                       # (N, K)
    b_folded = bias.astype(jnp.float32) - 0.5            # fold -0.5 once on host

    # Small-M fast path: launch + layout-plumbing overhead dominates -> pure fused XLA.
    if M < min_pallas_m and not force_pallas:
        out = jnp.maximum(x.astype(jnp.float32) @ w.T + b_folded, 0.0)
        return out if out_layout == "batch_major" else out.T

    xT = x.T.astype(jnp.float32)                         # (K, M): batch on lanes
    b2 = b_folded.reshape(N, 1)

    MIN_TILE = 128
    if M >= 2 * MIN_TILE:
        # Ensure >= 2 grid steps for moderate M (v7x megacore), cap payload at tile_m.
        tm = min(tile_m, _round_up(pl.cdiv(M, 2), MIN_TILE))
        grid = (pl.cdiv(M, tm),)                         # partial last block is clipped
    else:
        tm = M                                           # full-array block: legal at any M
        grid = (1,)

    outT = pl.pallas_call(
        linear_sub_relu_kernel,
        out_shape=jax.ShapeDtypeStruct((N, M), jnp.float32),
        grid=grid,
        in_specs=[
            pl.BlockSpec((K, tm), lambda i: (0, i)),
            pl.BlockSpec((N, K), lambda i: (0, 0)),      # W stays resident in VMEM
            pl.BlockSpec((N, 1), lambda i: (0, 0)),      # bias stays resident
        ],
        out_specs=pl.BlockSpec((N, tm), lambda i: (0, i)),
        compiler_params=pltpu.CompilerParams(
            dimension_semantics=("parallel",)),
    )(xT, w, b2)

    if out_layout == "feature_major":
        return outT                                      # (8, M), no extra HBM pass
    return outT.T                                        # PyTorch-facing (M, 8)


if __name__ == "__main__":
    key = jax.random.PRNGKey(0)
    k_x, k_w, k_b, k_big, k_big2 = jax.random.split(key, 5)

    # Deterministic Linear(3, 8) params (PyTorch layout: weight (8, 3), bias (8,))
    in_f, out_f = 3, 8
    bound = 1.0 / (in_f ** 0.5)
    weight = jax.random.uniform(k_w, (out_f, in_f), jnp.float32, -bound, bound)
    bias = jax.random.uniform(k_b, (out_f,), jnp.float32, -bound, bound)

    def ref_fn(xv):
        return jnp.maximum(xv @ weight.T + bias - 0.5, 0.0)

    # 1) Module's actual input shape: x2 ~ randn(1, 3) -> small-M fast path.
    x2 = jax.random.normal(k_x, (1, 3), dtype=jnp.float32)
    out = jax.block_until_ready(model_forward(x2, weight, bias))
    assert out.shape == (1, 8)
    assert jnp.allclose(out, ref_fn(x2), atol=1e-5, rtol=1e-5), (out, ref_fn(x2))

    # 2) Small M forced through the Pallas full-array-block path.
    x8 = jax.random.normal(k_x, (8, 3), dtype=jnp.float32)
    out8 = jax.block_until_ready(model_forward(x8, weight, bias, force_pallas=True))
    assert jnp.allclose(out8, ref_fn(x8), atol=1e-5, rtol=1e-5)

    # 3) Moderate M -> 2-step parallel grid (v7x megacore) with a partial last block.
    xb = jax.random.normal(k_big, (1029, 3), dtype=jnp.float32)
    outb = jax.block_until_ready(model_forward(xb, weight, bias))
    assert outb.shape == (1029, 8)
    assert jnp.allclose(outb, ref_fn(xb), atol=1e-5, rtol=1e-5)

    # 4) Explicit small tile -> many grid steps + partial block; also the zero-transpose
    #    feature-major output path.
    xc = jax.random.normal(k_big2, (4099, 3), dtype=jnp.float32)
    outc = jax.block_until_ready(model_forward(xc, weight, bias, tile_m=1024))
    assert jnp.allclose(outc, ref_fn(xc), atol=1e-5, rtol=1e-5)
    outc_fm = jax.block_until_ready(
        model_forward(xc, weight, bias, tile_m=1024, out_layout="feature_major"))
    assert outc_fm.shape == (8, 4099)
    assert jnp.allclose(outc_fm.T, ref_fn(xc), atol=1e-5, rtol=1e-5)

    print("KERNEL_OK")
</pallas_src>

<mosaic_0001>
module attributes {stable_mosaic.version = 11 : i64} {
  func.func @linear_sub_relu_kernel(%arg0: i32, %arg1: memref<3x8xf32, #tpu.memory_space<vmem>>, %arg2: memref<8x3xf32, #tpu.memory_space<vmem>>, %arg3: memref<8x1xf32, #tpu.memory_space<vmem>>, %arg4: memref<8x8xf32, #tpu.memory_space<vmem>>) attributes {dimension_semantics = [#tpu.dimension_semantics<parallel>], iteration_bounds = array<i64: 1>, scalar_prefetch = 0 : i64, scratch_operands = 0 : i64, tpu.core_type = #tpu.core_type<tc>, window_params = [{transform_indices = @transform_0, window_bounds = array<i64: 3, 8>}, {pipeline_mode = #tpu.pipeline_mode<synchronous>, transform_indices = @transform_1, window_bounds = array<i64: 8, 3>}, {pipeline_mode = #tpu.pipeline_mode<synchronous>, transform_indices = @transform_2, window_bounds = array<i64: 8, 1>}, {transform_indices = @transform_3, window_bounds = array<i64: 8, 8>}]} {
    %c0 = arith.constant 0 : index
    %c0_0 = arith.constant 0 : index
    %0 = vector.load %arg1[%c0, %c0_0] : memref<3x8xf32, #tpu.memory_space<vmem>>, vector<3x8xf32>
    %c0_1 = arith.constant 0 : index
    %c0_2 = arith.constant 0 : index
    %1 = vector.load %arg2[%c0_1, %c0_2] : memref<8x3xf32, #tpu.memory_space<vmem>>, vector<8x3xf32>
    %2 = vector.extract_strided_slice %1 {offsets = [0, 0], sizes = [8, 1], strides = [1, 1]} : vector<8x3xf32> to vector<8x1xf32>
    %3 = vector.extract_strided_slice %0 {offsets = [0, 0], sizes = [1, 8], strides = [1, 1]} : vector<3x8xf32> to vector<1x8xf32>
    %4 = vector.broadcast %2 : vector<8x1xf32> to vector<8x8xf32>
    %5 = vector.broadcast %3 : vector<1x8xf32> to vector<8x8xf32>
    %6 = arith.mulf %4, %5 : vector<8x8xf32>
    %7 = vector.extract_strided_slice %1 {offsets = [0, 1], sizes = [8, 1], strides = [1, 1]} : vector<8x3xf32> to vector<8x1xf32>
    %8 = vector.extract_strided_slice %0 {offsets = [1, 0], sizes = [1, 8], strides = [1, 1]} : vector<3x8xf32> to vector<1x8xf32>
    %9 = vector.broadcast %7 : vector<8x1xf32> to vector<8x8xf32>
    %10 = vector.broadcast %8 : vector<1x8xf32> to vector<8x8xf32>
    %11 = arith.mulf %9, %10 : vector<8x8xf32>
    %12 = arith.addf %6, %11 : vector<8x8xf32>
    %13 = vector.extract_strided_slice %1 {offsets = [0, 2], sizes = [8, 1], strides = [1, 1]} : vector<8x3xf32> to vector<8x1xf32>
    %14 = vector.extract_strided_slice %0 {offsets = [2, 0], sizes = [1, 8], strides = [1, 1]} : vector<3x8xf32> to vector<1x8xf32>
    %15 = vector.broadcast %13 : vector<8x1xf32> to vector<8x8xf32>
    %16 = vector.broadcast %14 : vector<1x8xf32> to vector<8x8xf32>
    %17 = arith.mulf %15, %16 : vector<8x8xf32>
    %18 = arith.addf %12, %17 : vector<8x8xf32>
    %c0_3 = arith.constant 0 : index
    %c0_4 = arith.constant 0 : index
    %19 = vector.load %arg3[%c0_3, %c0_4] : memref<8x1xf32, #tpu.memory_space<vmem>>, vector<8x1xf32>
    %20 = vector.broadcast %19 : vector<8x1xf32> to vector<8x8xf32>
    %21 = arith.addf %18, %20 : vector<8x8xf32>
    %cst = arith.constant 0.000000e+00 : f32
    %22 = vector.broadcast %cst : f32 to vector<8x8xf32>
    %23 = arith.maximumf %21, %22 : vector<8x8xf32>
    %c0_5 = arith.constant 0 : index
    %c0_6 = arith.constant 0 : index
    %24 = vector.load %arg4[%c0_5, %c0_6] : memref<8x8xf32, #tpu.memory_space<vmem>>, vector<8x8xf32>
    tpu.vector_store %arg4[%c0_5, %c0_6], %23 {strides = array<i32>} : memref<8x8xf32, #tpu.memory_space<vmem>>, vector<8x8xf32>,
    return
  }
  func.func @transform_0(%arg0: i32) -> (i32, i32) {
    %c0_i32 = arith.constant 0 : i32
    %c0_i32_0 = arith.constant 0 : i32
    return %c0_i32, %arg0 : i32, i32
  }
  func.func @transform_1(%arg0: i32) -> (i32, i32) {
    %c0_i32 = arith.constant 0 : i32
    %c0_i32_0 = arith.constant 0 : i32
    %c0_i32_1 = arith.constant 0 : i32
    return %c0_i32, %c0_i32_0 : i32, i32
  }
  func.func @transform_2(%arg0: i32) -> (i32, i32) {
    %c0_i32 = arith.constant 0 : i32
    %c0_i32_0 = arith.constant 0 : i32
    %c0_i32_1 = arith.constant 0 : i32
    return %c0_i32, %c0_i32_0 : i32, i32
  }
  func.func @transform_3(%arg0: i32) -> (i32, i32) {
    %c0_i32 = arith.constant 0 : i32
    %c0_i32_0 = arith.constant 0 : i32
    return %c0_i32, %arg0 : i32, i32
  }
}

</mosaic_0001>

<llo_original>
// kernel: tpu_custom_call.1
$region0: #{tpu_custom_call.1}
  #allocation0 [shape = 'u32[]', space=smem, size = 0x4, offset = 0x4, fixed_abs, tag = 'smem constant byte address 0x4 - core index']
  #allocation1 [shape = 'u32[72,128]{1,0:T(1,128)}', space=vmem, size = 0x9000, scoped, tag = 'internal scratch']
  %s0 = inlined_call_operand.vmem [shape: f32[3,8], index: 0, kind: input, shape index: {}]
  %s1 = inlined_call_operand.vmem [shape: f32[8,3], index: 1, kind: input, shape index: {}]
  %s2 = inlined_call_operand.vmem [shape: f32[8,1], index: 2, kind: input, shape index: {}]
  %s3 = inlined_call_operand.hbm [shape: f32[8,8], index: 3, kind: output, shape index: {}]
  %s4 = sld [smem:[#allocation0]]
  $region22: #{tpu_custom_call.1} parent=0
    _
  %s6 = ssub.s32 1, %s4
  %s7 = scalar_select 0, %s6, %s4
  $region1: #{tpu_custom_call.1} parent=0
    #allocation2 [shape = 'u8[4096]{0}', space=vmem, size = 0x1000, scoped, tag = 'output window, operand 0, single buffered']
    #allocation3 [shape = 's32[1]{0}', space=sflag, size = 0x4, scoped, tag = 'scoped memory for tpu_custom_call.1']
    %8 = vsyncpa [#allocation3], 0
    // Predicated region
    $region2: #{tpu_custom_call.1} parent=1 // pred_check
      _
    $region3: #{tpu_custom_call.1} parent=1 // pred_check_branch
      %10 = sbr.rel (0) target = $region5
    $region4: #{tpu_custom_call.1} parent=1 // pred_region
      _
    $region5: #{tpu_custom_call.1} parent=1 // pred_fallthru
      _
    // Predicated region
    $region6: #{tpu_custom_call.1} parent=1 // pred_check
      _
    $region7: #{tpu_custom_call.1} parent=1 // pred_check_branch
      %12 = sbr.rel (0) target = $region9
    $region8: #{tpu_custom_call.1} parent=1 // pred_region
      _
    $region9: #{tpu_custom_call.1} parent=1 // pred_fallthru
      _
    // Predicated region
    $region10: #{tpu_custom_call.1} parent=1 // pred_check
      _
    $region11: #{tpu_custom_call.1} parent=1 // pred_check_branch
      %14 = sbr.rel (0) target = $region13
    $region12: #{tpu_custom_call.1} parent=1 // pred_region
      _
    $region13: #{tpu_custom_call.1} parent=1 // pred_fallthru
      _
    %v15 = vld [vmem:[%s0] sm:$0x7]
    %v16 = vld [vmem:[%s1] sm:$0xff]
    %18 = vset.pattern.permute.xlu0 0
    %19 = vperm.xlu0 %18, %v16
    %v20 = vpop.permute.xlu0 %19
    %v22 = vperm.slane %v15, 0
    %v23 = vmul.f32 %v20, %v22
    %24 = vset.pattern.permute.xlu0 1
    %25 = vperm.xlu0 %24, %v16
    %v26 = vpop.permute.xlu0 %25
    %v28 = vperm.slane %v15, 1
    %v29 = vmul.f32 %v26, %v28
    %v30 = vadd.f32 %v23, %v29
    %31 = vset.pattern.permute.xlu0 2
    %32 = vperm.xlu0 %31, %v16
    %v33 = vpop.permute.xlu0 %32
    %v35 = vperm.slane %v15, 2
    %v36 = vmul.f32 %v33, %v35
    %v37 = vadd.f32 %v30, %v36
    %v38 = vld [vmem:[%s2] sm:$0xff]
    %40 = vset.pattern.permute.xlu0 0
    %41 = vperm.xlu0 %40, %v38
    %v42 = vpop.permute.xlu0 %41
    %v44 = vadd.f32 %v37, %v42
    %v45 = vmax.f32 %v44, 0.0
    %vm46 = vcmask 64512
    %47 = vst.msk [vmem:[#allocation2] sm:$0xff] %vm46, %v45
    // Predicated region
    $region14: #{tpu_custom_call.1} parent=1 // pred_check
      _
    $region15: #{tpu_custom_call.1} parent=1 // pred_check_branch
      %49 = sbr.rel (0) target = $region17
    $region16: #{tpu_custom_call.1} parent=1 // pred_region
      %51 = vsyncadd [#allocation3], 0
      %s53 = sshll.u32 [#allocation2], 4
      %s54 = int_to_ptr.vmem [resolvable:$true] %s53
      %s55 = sshll.u32 %s3, 4
      %s56 = int_to_ptr.hbm [resolvable:$true] %s55
      %58 = dma.vmem_to_hbm [thread:$0]  %s54, 128, %s56, [#allocation3]
    $region17: #{tpu_custom_call.1} parent=1 // pred_fallthru
      _
    // Predicated region
    $region18: #{tpu_custom_call.1} parent=1 // pred_check
      _
    $region19: #{tpu_custom_call.1} parent=1 // pred_check_branch
      %60 = sbr.rel (0) target = $region21
    $region20: #{tpu_custom_call.1} parent=1 // pred_region
      %62 = dma.done [#allocation3], 128
    $region21: #{tpu_custom_call.1} parent=1 // pred_fallthru
      _
    %63 = vsyncpa [#allocation3], 1

</llo_original>
